<compile_context>
chip_gen: v5e
topology: v5e:2x2
jax: 0.10.0
libtpu: 0.0.40
codegen_flags: <defaults>
</compile_context>

<pallas_src>
import functools

import jax
import jax.numpy as jnp
from jax.experimental import pallas as pl
from jax.experimental.pallas import tpu as pltpu


def _cdiv(a, b):
    return (a + b - 1) // b


def _round_up(n, m):
    return _cdiv(n, m) * m


_VMEM_BUDGET = 12 << 20       # keep estimate under v5e's 16 MiB default scoped VMEM
_VMEM_LIMIT = 32 << 20        # explicit scoped-VMEM limit (<= v7x 64 MiB physical)
_CENTERS_VMEM_CAP = 6 << 20   # resident-centers cutoff for the fused path


def _masked_row_sums(d, tile_b, batch_size):
    # Torch clamps AFTER masking: the label-hit entry is clamped here; the
    # (C-1) masked-out entries per row are added back analytically in the
    # wrapper.  Clip BEFORE the row mask so unspecified data in ragged edge
    # blocks (possibly Inf/NaN) never reaches the sum.
    d = jnp.clip(d, 1e-12, 1e12)
    row = pl.program_id(0) * tile_b + jax.lax.broadcasted_iota(
        jnp.int32, (tile_b, 1), 0)
    return jnp.where(row < batch_size, d, 0.0)


def _center_loss_kernel_fused(x_ref, labels_ref, centers_ref, out_ref, *,
                              tile_b, batch_size, num_classes):
    x = x_ref[...].astype(jnp.float32)               # (TB, D) features
    labels = labels_ref[...]                          # (TB, 1) int32 labels
    centers = centers_ref[...].astype(jnp.float32)    # (C, D), grid-invariant

    # In-kernel gather of each row's own center: one-hot matmul on the MXU
    # (the MXU is otherwise idle; tb*C*D MACs are noise on all generations).
    class_ids = jax.lax.broadcasted_iota(jnp.int32, (tile_b, num_classes), 1)
    onehot = (labels == class_ids).astype(jnp.float32)              # (TB, C)
    cg = jnp.dot(onehot, centers, preferred_element_type=jnp.float32)

    diff = x - cg                                     # one XLU reduce per row
    d = jnp.sum(diff * diff, axis=1, keepdims=True)   # (TB, 1)
    d = _masked_row_sums(d, tile_b, batch_size)

    # Lane-dense partial sum: one full (8, 128) vreg per grid step.
    out_ref[...] = jnp.full((1, 8, 128), jnp.sum(d), dtype=jnp.float32)


def _center_loss_kernel_pregather(x_ref, cg_ref, out_ref, *, tile_b, batch_size):
    x = x_ref[...].astype(jnp.float32)    # (TB, D)
    cg = cg_ref[...].astype(jnp.float32)  # (TB, D) pre-gathered centers
    diff = x - cg
    d = jnp.sum(diff * diff, axis=1, keepdims=True)
    d = _masked_row_sums(d, tile_b, batch_size)
    out_ref[...] = jnp.full((1, 8, 128), jnp.sum(d), dtype=jnp.float32)


def _choose_tile(B, D, C, x_itemsize, c_itemsize, fused):
    # ~2 MiB per x block amortizes the ~0.35 us per-grid-step overhead
    # (streaming kernels hit ~85% of HBM roofline at 512+ wide tiles).
    tb = (2 << 20) // max(1, D * x_itemsize)
    tb = max(8, min(4096, (tb // 8) * 8))
    tb = min(tb, _round_up(B, 8))
    if B > 8:
        # >= 2 tiles so dimension_semantics=("parallel",) can use both v7x TCs.
        tb = min(tb, _round_up(_cdiv(B, 2), 8))

    def footprint(t):
        fp = 2 * t * D * x_itemsize               # x, double-buffered
        fp += 3 * t * D * 4                       # f32 x / cg / diff intermediates
        fp += 2 * 2 * 8 * 128 * 4                 # partial-sum output blocks
        if fused:
            fp += 2 * t * 4                       # labels, double-buffered
            fp += 2 * C * D * c_itemsize + C * D * 4   # centers (+ f32 promote)
            fp += t * C * 4                       # one-hot tile
        else:
            fp += 2 * t * D * c_itemsize          # pre-gathered cg, double-buffered
        return fp

    while tb > 8 and footprint(tb) > _VMEM_BUDGET:
        tb -= 8
    return tb


def center_loss(x, centers, labels):
    """Pallas CenterLoss forward.

    x: (B, D) feature matrix, centers: (C, D), labels: (B,) integer class ids.
    """
    B, D = x.shape
    C, Dc = centers.shape
    assert D == Dc
    x_itemsize = jnp.dtype(x.dtype).itemsize
    c_itemsize = jnp.dtype(centers.dtype).itemsize

    fused = C * D * (c_itemsize + 4) <= _CENTERS_VMEM_CAP
    tb = _choose_tile(B, D, C, x_itemsize, c_itemsize, fused)
    n_tiles = _cdiv(B, tb)
    b_pad = n_tiles * tb

    out_shape = jax.ShapeDtypeStruct((n_tiles, 8, 128), jnp.float32)
    out_spec = pl.BlockSpec((1, 8, 128), lambda i: (i, 0, 0))
    x_spec = pl.BlockSpec((tb, D), lambda i: (i, 0))
    compiler_params = pltpu.CompilerParams(
        dimension_semantics=("parallel",),
        vmem_limit_bytes=_VMEM_LIMIT)

    if fused:
        labels2d = labels.astype(jnp.int32).reshape(B, 1)
        kernel = functools.partial(
            _center_loss_kernel_fused, tile_b=tb, batch_size=B, num_classes=C)
        cost = pl.CostEstimate(
            flops=2 * b_pad * C * D + 4 * b_pad * D,
            transcendentals=0,
            bytes_accessed=(B * D * x_itemsize + B * 4
                            + C * D * c_itemsize + n_tiles * 8 * 128 * 4),
        )
        partials = pl.pallas_call(
            kernel,
            out_shape=out_shape,
            grid=(n_tiles,),
            in_specs=[
                x_spec,                                     # x tile
                pl.BlockSpec((tb, 1), lambda i: (i, 0)),    # labels tile
                pl.BlockSpec((C, D), lambda i: (0, 0)),     # centers, resident
            ],
            out_specs=out_spec,
            compiler_params=compiler_params,
            cost_estimate=cost,
        )(x, labels2d, centers)
    else:
        # TODO(synk): huge center tables (C*D beyond the VMEM budget) fall back
        # to an XLA gather of c[labels]; a paged in-kernel DMA gather would
        # avoid the (B, D) HBM intermediate.
        cg = jnp.take(centers, labels.astype(jnp.int32), axis=0)
        kernel = functools.partial(
            _center_loss_kernel_pregather, tile_b=tb, batch_size=B)
        cost = pl.CostEstimate(
            flops=4 * b_pad * D,
            transcendentals=0,
            bytes_accessed=(2 * B * D * x_itemsize + n_tiles * 8 * 128 * 4),
        )
        partials = pl.pallas_call(
            kernel,
            out_shape=out_shape,
            grid=(n_tiles,),
            in_specs=[x_spec, pl.BlockSpec((tb, D), lambda i: (i, 0))],
            out_specs=out_spec,
            compiler_params=compiler_params,
            cost_estimate=cost,
        )(x, cg)

    total = jnp.sum(partials[:, 0, 0])
    # Each row's (C-1) masked-out distmat entries are clamped up to 1e-12 by
    # torch's clamp-after-mask; add that constant back analytically.
    total = total + jnp.float32(B * (C - 1)) * jnp.float32(1e-12)
    return total / jnp.float32(B)


def center_loss_reference(x, centers, labels):
    """Pure-JAX reference mirroring the PyTorch forward exactly."""
    B = x.shape[0]
    C = centers.shape[0]
    xf = x.astype(jnp.float32)
    cf = centers.astype(jnp.float32)
    distmat = (
        jnp.sum(xf * xf, axis=1, keepdims=True)
        + jnp.sum(cf * cf, axis=1, keepdims=True).T
        - 2.0 * xf @ cf.T
    )
    mask = (labels[:, None] == jnp.arange(C)[None, :]).astype(jnp.float32)
    dist = jnp.clip(distmat * mask, 1e-12, 1e12)
    return jnp.sum(dist) / B


if __name__ == "__main__":
    key = jax.random.PRNGKey(0)

    def run_case(key, batch, num_classes, feat_dim):
        kx, kc, kl, key = jax.random.split(key, 4)
        x = jax.random.normal(kx, (batch, feat_dim), dtype=jnp.float32)
        centers = jax.random.normal(kc, (num_classes, feat_dim),
                                    dtype=jnp.float32)
        labels = jax.random.randint(kl, (batch,), 0, num_classes,
                                    dtype=jnp.int32)
        loss = center_loss(x, centers, labels)
        jax.block_until_ready(loss)
        ref = center_loss_reference(x, centers, labels)
        assert jnp.allclose(loss, ref, rtol=1e-5, atol=1e-5), (loss, ref)
        return key

    # Case 1: small shapes consistent with the module (B=8, C=16, D=32).
    key = run_case(key, batch=8, num_classes=16, feat_dim=32)

    # Case 2: module defaults (num_classes=10, feat_dim=2) with a batch that
    # is not a multiple of 8 -> exercises the unpadded ragged-edge block.
    key = run_case(key, batch=6, num_classes=10, feat_dim=2)

    # Case 3: multi-tile grid with a ragged last tile (>=2 tiles for megacore).
    key = run_case(key, batch=300, num_classes=37, feat_dim=96)

    print("KERNEL_OK")
</pallas_src>

<mosaic_0001>
module attributes {stable_mosaic.version = 11 : i64} {
  func.func @_center_loss_kernel_fused(%arg0: i32, %arg1: memref<8x32xf32, #tpu.memory_space<vmem>>, %arg2: memref<8x1xi32, #tpu.memory_space<vmem>>, %arg3: memref<16x32xf32, #tpu.memory_space<vmem>>, %arg4: memref<1x8x128xf32, #tpu.memory_space<vmem>>) attributes {dimension_semantics = [#tpu.dimension_semantics<parallel>], iteration_bounds = array<i64: 1>, scalar_prefetch = 0 : i64, scratch_operands = 0 : i64, tpu.core_type = #tpu.core_type<tc>, window_params = [{transform_indices = @transform_0, window_bounds = array<i64: 8, 32>}, {transform_indices = @transform_1, window_bounds = array<i64: 8, 1>}, {pipeline_mode = #tpu.pipeline_mode<synchronous>, transform_indices = @transform_2, window_bounds = array<i64: 16, 32>}, {transform_indices = @transform_3, window_bounds = array<i64: 1, 8, 128>}]} {
    %c0 = arith.constant 0 : index
    %c0_0 = arith.constant 0 : index
    %0 = vector.load %arg1[%c0, %c0_0] : memref<8x32xf32, #tpu.memory_space<vmem>>, vector<8x32xf32>
    %c0_1 = arith.constant 0 : index
    %c0_2 = arith.constant 0 : index
    %1 = vector.load %arg2[%c0_1, %c0_2] : memref<8x1xi32, #tpu.memory_space<vmem>>, vector<8x1xi32>
    %c0_3 = arith.constant 0 : index
    %c0_4 = arith.constant 0 : index
    %2 = vector.load %arg3[%c0_3, %c0_4] : memref<16x32xf32, #tpu.memory_space<vmem>>, vector<16x32xf32>
    %3 = tpu.iota {dimensions = array<i32: 1>} : vector<8x16xi32>
    %4 = vector.broadcast %1 : vector<8x1xi32> to vector<8x16xi32>
    %5 = arith.cmpi eq, %4, %3 : vector<8x16xi32>
    %6 = arith.extui %5 : vector<8x16xi1> to vector<8x16xi32>
    %7 = arith.sitofp %6 : vector<8x16xi32> to vector<8x16xf32>
    %cst = arith.constant dense<0.000000e+00> : vector<8x32xf32>
    %8 = tpu.matmul %7, %2, %cst {dimension_numbers = #tpu.dot_dimension_numbers<[1], [0], [0], [1], [0, 0, 1, 1], [], []>} : vector<8x16xf32>, vector<16x32xf32>, vector<8x32xf32> -> vector<8x32xf32>
    %9 = arith.subf %0, %8 : vector<8x32xf32>
    %10 = arith.mulf %9, %9 : vector<8x32xf32>
    %cst_5 = arith.constant dense<0.000000e+00> : vector<8xf32>
    %11 = vector.multi_reduction <add>, %10, %cst_5 [1] : vector<8x32xf32> to vector<8xf32>
    %12 = vector.shape_cast %11 : vector<8xf32> to vector<8x1xf32>
    %cst_6 = arith.constant 9.99999996E-13 : f32
    %cst_7 = arith.constant 9.99999995E+11 : f32
    %13 = vector.broadcast %cst_6 : f32 to vector<8x1xf32>
    %14 = arith.maximumf %13, %12 : vector<8x1xf32>
    %15 = vector.broadcast %cst_7 : f32 to vector<8x1xf32>
    %16 = arith.minimumf %15, %14 : vector<8x1xf32>
    %c8_i32 = arith.constant 8 : i32
    %17 = arith.muli %arg0, %c8_i32 : i32
    %18 = tpu.iota {dimensions = array<i32: 0>} : vector<8x1xi32>
    %19 = vector.broadcast %17 : i32 to vector<8x1xi32>
    %20 = arith.addi %19, %18 : vector<8x1xi32>
    %c8_i32_8 = arith.constant 8 : i32
    %21 = vector.broadcast %c8_i32_8 : i32 to vector<8x1xi32>
    %22 = arith.cmpi slt, %20, %21 : vector<8x1xi32>
    %cst_9 = arith.constant 0.000000e+00 : f32
    %23 = vector.broadcast %cst_9 : f32 to vector<8x1xf32>
    %24 = arith.select %22, %16, %23 : vector<8x1xi1>, vector<8x1xf32>
    %25 = vector.shape_cast %24 : vector<8x1xf32> to vector<1x8x1xf32>
    %cst_10 = arith.constant dense<0.000000e+00> : vector<1xf32>
    %26 = vector.multi_reduction <add>, %25, %cst_10 [1, 2] : vector<1x8x1xf32> to vector<1xf32>
    %27 = vector.shape_cast %26 : vector<1xf32> to vector<1x1x1xf32>
    %28 = vector.extract %27[0, 0, 0] : f32 from vector<1x1x1xf32>
    %29 = vector.broadcast %28 : f32 to vector<1x8x128xf32>
    %c0_11 = arith.constant 0 : index
    %c0_12 = arith.constant 0 : index
    %c0_13 = arith.constant 0 : index
    %30 = vector.load %arg4[%c0_11, %c0_12, %c0_13] : memref<1x8x128xf32, #tpu.memory_space<vmem>>, vector<1x8x128xf32>
    tpu.vector_store %arg4[%c0_11, %c0_12, %c0_13], %29 {strides = array<i32>} : memref<1x8x128xf32, #tpu.memory_space<vmem>>, vector<1x8x128xf32>,
    return
  }
  func.func @transform_0(%arg0: i32) -> (i32, i32) {
    %c0_i32 = arith.constant 0 : i32
    %c0_i32_0 = arith.constant 0 : i32
    return %arg0, %c0_i32 : i32, i32
  }
  func.func @transform_1(%arg0: i32) -> (i32, i32) {
    %c0_i32 = arith.constant 0 : i32
    %c0_i32_0 = arith.constant 0 : i32
    return %arg0, %c0_i32 : i32, i32
  }
  func.func @transform_2(%arg0: i32) -> (i32, i32) {
    %c0_i32 = arith.constant 0 : i32
    %c0_i32_0 = arith.constant 0 : i32
    %c0_i32_1 = arith.constant 0 : i32
    return %c0_i32, %c0_i32_0 : i32, i32
  }
  func.func @transform_3(%arg0: i32) -> (i32, i32, i32) {
    %c0_i32 = arith.constant 0 : i32
    %c0_i32_0 = arith.constant 0 : i32
    %c0_i32_1 = arith.constant 0 : i32
    return %arg0, %c0_i32, %c0_i32_0 : i32, i32, i32
  }
}

</mosaic_0001>

<llo_original>
// kernel: tpu_custom_call.1
$region0: #{tpu_custom_call.1}
  #allocation0 [shape = 'u32[]', space=smem, size = 0x4, offset = 0x4, fixed_abs, tag = 'smem constant byte address 0x4 - core index']
  #allocation1 [shape = 'u32[72,128]{1,0:T(1,128)}', space=vmem, size = 0x9000, scoped, tag = 'internal scratch']
  %s0 = inlined_call_operand.vmem [shape: f32[8,32], index: 0, kind: input, shape index: {}]
  %s1 = inlined_call_operand.vmem [shape: s32[8,1], index: 1, kind: input, shape index: {}]
  %s2 = inlined_call_operand.hbm [shape: f32[16,32], index: 2, kind: input, shape index: {}]
  %s3 = inlined_call_operand.hbm [shape: f32[1,8,128], index: 3, kind: output, shape index: {}]
  %s4 = sld [smem:[#allocation0]]
  $region26: #{tpu_custom_call.1} parent=0
    _
  %s6 = ssub.s32 1, %s4
  %s7 = scalar_select 0, %s6, %s4
  $region1: #{tpu_custom_call.1} parent=0
    #allocation2 [shape = 'u8[8192]{0}', space=vmem, size = 0x2000, scoped, tag = 'input window, operand 2, single buffered']
    #allocation3 [shape = 's32[1]{0}', space=sflag, size = 0x4, scoped, tag = 'scoped memory for tpu_custom_call.1']
    #allocation4 [shape = 's32[1]{0}', space=sflag, size = 0x4, scoped, tag = 'scoped memory for tpu_custom_call.1']
    #allocation5 [shape = 'u8[4096]{0}', space=vmem, size = 0x1000, scoped, tag = 'output window, operand 0, single buffered']
    %8 = vsyncpa [#allocation3], 0
    %9 = vsyncpa [#allocation4], 0
    // Predicated region
    $region2: #{tpu_custom_call.1} parent=1 // pred_check
      _
    $region3: #{tpu_custom_call.1} parent=1 // pred_check_branch
      %11 = sbr.rel (0) target = $region5
    $region4: #{tpu_custom_call.1} parent=1 // pred_region
      _
    $region5: #{tpu_custom_call.1} parent=1 // pred_fallthru
      _
    // Predicated region
    $region6: #{tpu_custom_call.1} parent=1 // pred_check
      _
    $region7: #{tpu_custom_call.1} parent=1 // pred_check_branch
      %13 = sbr.rel (0) target = $region9
    $region8: #{tpu_custom_call.1} parent=1 // pred_region
      _
    $region9: #{tpu_custom_call.1} parent=1 // pred_fallthru
      _
    // Predicated region
    $region10: #{tpu_custom_call.1} parent=1 // pred_check
      _
    $region11: #{tpu_custom_call.1} parent=1 // pred_check_branch
      %15 = sbr.rel (0) target = $region13
    $region12: #{tpu_custom_call.1} parent=1 // pred_region
      %17 = vsyncadd [#allocation3], 0
      %s18 = sshll.u32 %s2, 4
      %s19 = int_to_ptr.hbm [resolvable:$true] %s18
      %s20 = sshll.u32 [#allocation2], 4
      %s21 = int_to_ptr.vmem [resolvable:$true] %s20
      %26 = dma.hbm_to_vmem [thread:$0]  %s19, 256, %s21, [#allocation3], 128, 128, 8
    $region13: #{tpu_custom_call.1} parent=1 // pred_fallthru
      _
    // Predicated region
    $region14: #{tpu_custom_call.1} parent=1 // pred_check
      _
    $region15: #{tpu_custom_call.1} parent=1 // pred_check_branch
      %28 = sbr.rel (0) target = $region17
    $region16: #{tpu_custom_call.1} parent=1 // pred_region
      %30 = dma.done [#allocation3], 256
    $region17: #{tpu_custom_call.1} parent=1 // pred_fallthru
      _
    %v31 = vld [vmem:[%s0] sm:$0xff]
    %v32 = vld [vmem:[%s1] sm:$0xff]
    %v33 = vld [vmem:[#allocation2] sm:$0xff]
    %v34 = vld [vmem:[#allocation2 + $0x8] sm:$0xff]
    %v35 = vlaneseq
    %v36 = vand.u32 %v35, 127
    %37 = vset.pattern.permute.xlu0 0
    %38 = vperm.xlu0 %37, %v32
    %v39 = vpop.permute.xlu0 %38
    %vm40 = vcmp.eq.s32.totalorder %v39, %v36
    %v41 = vsel %vm40, 1, 0
    %v42 = vcvt.s32.f32 %v41
    %vm43 = vcmask 130048
    %v45 = vsel %vm43, %v42, 0
    %47 = vmatpush.msra.mxu0 0.0
    %48 = vmatpush.msra.mxu0 0.0
    %49 = vmatpush.msra.mxu0 0.0
    %50 = vmatpush.msra.mxu0 0.0
    %51 = vmatpush.msra.mxu0 0.0
    %52 = vmatpush.msra.mxu0 0.0
    %53 = vmatpush.msra.mxu0 0.0
    %54 = vmatpush.msra.mxu0 0.0
    %55 = vmatpush.msra.mxu0 0.0
    %56 = vmatpush.msra.mxu0 0.0
    %57 = vmatpush.msra.mxu0 0.0
    %58 = vmatpush.msra.mxu0 0.0
    %59 = vmatpush.msra.mxu0 0.0
    %60 = vmatpush.msra.mxu0 0.0
    %61 = vmatpush.msra.mxu0 %v34
    %62 = vmatpush.msra.mxu0 %v33
    %63 = vmatmul.f32.gmra.mxu0 %v45
    %v64 = vpop.f32.mrf.mxu0
    %v65 = vadd.f32 0.0, %v64
    %66 = vdwg.mxu0
    %v67 = vsub.f32 %v31, %v65
    %v68 = vmul.f32 %v67, %v67
    %vm69 = vcmask 261120
    %v70 = vsel %vm69, %v68, 0.0
    %71 = vadd.xlane.f32.xlu0 %v70
    %v72 = vpop.xlane.xlu0 %71
    %v73 = vmax.f32 %v72, 1e-12
    %v74 = vmin.f32 %v73, 1e+12
    %s75 = smul.u32 0, 8
    %v76 = vlaneseq
    %v77 = vshrl.u32 %v76, 7
    %v78 = vstv %s75
    %v79 = vadd.s32 %v78, %v77
    %vm80 = vcmp.lt.s32.totalorder %v79, 8
    %v81 = vsel %vm80, %v74, 0.0
    %vm82 = vcmask 7168
    %v83 = vsel %vm82, %v81, 0.0
    %84 = vadd.xlane.f32.xlu0 %v83
    %v85 = vpop.xlane.xlu0 %84
    %v86 = vrot.slane %v85, 4
    %v87 = vadd.f32 %v85, %v86
    %v88 = vrot.slane %v87, 2
    %v89 = vadd.f32 %v87, %v88
    %v90 = vrot.slane %v89, 1
    %v91 = vadd.f32 %v89, %v90
    %s92 = vtos %v91
    %v93 = vstv %s92
    %94 = vst [vmem:[#allocation5] sm:$0xff] %v93
    // Predicated region
    $region18: #{tpu_custom_call.1} parent=1 // pred_check
      _
    $region19: #{tpu_custom_call.1} parent=1 // pred_check_branch
      %96 = sbr.rel (0) target = $region21
    $region20: #{tpu_custom_call.1} parent=1 // pred_region
      %98 = vsyncadd [#allocation4], 0
      %s100 = sshll.u32 [#allocation5], 4
      %s101 = int_to_ptr.vmem [resolvable:$true] %s100
      %s102 = sshll.u32 %s3, 4
      %s103 = int_to_ptr.hbm [resolvable:$true] %s102
      %105 = dma.vmem_to_hbm [thread:$0]  %s101, 128, %s103, [#allocation4]
    $region21: #{tpu_custom_call.1} parent=1 // pred_fallthru
      _
    // Predicated region
    $region22: #{tpu_custom_call.1} parent=1 // pred_check
      _
    $region23: #{tpu_custom_call.1} parent=1 // pred_check_branch
      %107 = sbr.rel (0) target = $region25
    $region24: #{tpu_custom_call.1} parent=1 // pred_region
      %109 = dma.done [#allocation4], 128
    $region25: #{tpu_custom_call.1} parent=1 // pred_fallthru
      _
    %110 = vsyncpa [#allocation3], 1
    %111 = vsyncpa [#allocation4], 1

</llo_original>
